<compile_context>
chip_gen: v7x
topology: tpu7x:2x2x1
jax: 0.10.0
libtpu: 0.0.40
codegen_flags: <defaults>
</compile_context>

<pallas_src>
import jax
import jax.numpy as jnp
from jax.experimental import pallas as pl
from jax.experimental.pallas import tpu as pltpu

LANE = 128           # lane width of a vreg
SUBLANE = 8          # sublane count of a vreg
TILE_B_MAX = 1024    # batch rows per grid step; ~1 MiB double-buffered out tile,
                     # comfortably inside v7x's 64 MiB VMEM


def _round_up(x, m):
    return ((x + m - 1) // m) * m


def _mlp_kernel(x_ref, w1_ref, b1_ref, w2_ref, b2_ref, o_ref):
    # Layer 1: Linear(2 -> Hp) as two VPU rank-1 broadcast-FMAs (K=2 is too
    # shallow to be worth the MXU), then bias + ReLU.  Padded hidden lanes have
    # zero weights and zero bias, so they stay exactly 0 through the ReLU.
    x = x_ref[...]                                    # (TILE_B, 2) f32
    w1 = w1_ref[...]                                  # (2, Hp)    f32
    h = x[:, 0:1] * w1[0:1, :] + x[:, 1:2] * w1[1:2, :] + b1_ref[...]
    h = jnp.maximum(h, 0.0)                           # (TILE_B, Hp)

    # Layer 2: Linear(Hp -> Np) on the MXU, f32 accumulation.  Padded W2
    # rows/cols are zero, so padded output lanes carry only the (zero) bias.
    out = jnp.dot(h, w2_ref[...], preferred_element_type=jnp.float32)
    o_ref[...] = (out + b2_ref[...]).astype(o_ref.dtype)


def classifier_forward(x, w1, b1, w2, b2, *, tile_b_max=TILE_B_MAX):
    """x: [B, 2] f32 -> logits [B, nlabel] f32 (no final activation, matches module).

    w1: [2, hidden], b1: [hidden] or [1, hidden]
    w2: [hidden, nlabel], b2: [nlabel] or [1, nlabel]
    (weights are [in, out], i.e. transposed vs. torch's nn.Linear storage)
    """
    B, f_in = x.shape
    hidden = w1.shape[1]
    nlabel = w2.shape[1]
    assert f_in == 2 and w1.shape[0] == 2 and w2.shape[0] == hidden

    dt = jnp.float32
    hp = _round_up(hidden, LANE)      # padded hidden (lane-dense vreg / MXU K)
    np_ = _round_up(nlabel, LANE)     # padded output lanes (unmasked vst)

    # Zero-pad params to lane-dense shapes; zeros keep the math exact.
    w1p = jnp.zeros((2, hp), dt).at[:, :hidden].set(w1.astype(dt))
    b1p = jnp.zeros((1, hp), dt).at[:, :hidden].set(b1.reshape(1, hidden).astype(dt))
    w2p = jnp.zeros((hp, np_), dt).at[:hidden, :nlabel].set(w2.astype(dt))
    b2p = jnp.zeros((1, np_), dt).at[:, :nlabel].set(b2.reshape(1, nlabel).astype(dt))

    # Batch tiling: tile is a multiple of 8 sublanes; pad B up to a whole number
    # of tiles (padded rows are zeros and sliced off afterwards).
    tile_b = min(tile_b_max, _round_up(B, SUBLANE))
    b_pad = _round_up(B, tile_b)
    xp = x.astype(dt)
    if b_pad != B:
        xp = jnp.zeros((b_pad, 2), dt).at[:B].set(xp)

    grid = (b_pad // tile_b,)
    out = pl.pallas_call(
        _mlp_kernel,
        out_shape=jax.ShapeDtypeStruct((b_pad, np_), dt),
        grid=grid,
        in_specs=[
            pl.BlockSpec((tile_b, 2), lambda i: (i, 0)),    # x: streamed per tile
            pl.BlockSpec((2, hp),     lambda i: (0, 0)),    # w1: resident
            pl.BlockSpec((1, hp),     lambda i: (0, 0)),    # b1: resident
            pl.BlockSpec((hp, np_),   lambda i: (0, 0)),    # w2: resident
            pl.BlockSpec((1, np_),    lambda i: (0, 0)),    # b2: resident
        ],
        out_specs=pl.BlockSpec((tile_b, np_), lambda i: (i, 0)),
        compiler_params=pltpu.CompilerParams(
            dimension_semantics=("parallel",),              # split tiles across TCs (v7x)
        ),
    )(xp, w1p, b1p, w2p, b2p)

    return out[:B, :nlabel]


def init_params(key, in_features=2, hidden=64, nlabel=16):
    """Deterministic synthetic init (Kaiming-uniform-ish like torch defaults)."""
    k1, k2, k3, k4 = jax.random.split(key, 4)
    lim1 = 1.0 / jnp.sqrt(in_features)
    lim2 = 1.0 / jnp.sqrt(hidden)
    w1 = jax.random.uniform(k1, (in_features, hidden), jnp.float32, -lim1, lim1)
    b1 = jax.random.uniform(k2, (1, hidden), jnp.float32, -lim1, lim1)
    w2 = jax.random.uniform(k3, (hidden, nlabel), jnp.float32, -lim2, lim2)
    b2 = jax.random.uniform(k4, (1, nlabel), jnp.float32, -lim2, lim2)
    return w1, b1, w2, b2


if __name__ == "__main__":
    key = jax.random.PRNGKey(0)
    kx, kx2, kp = jax.random.split(key, 3)

    F_IN, HIDDEN, NLABEL = 2, 64, 16
    w1, b1, w2, b2 = init_params(kp, F_IN, HIDDEN, NLABEL)

    def ref_fn(xx):
        return jnp.maximum(xx @ w1 + b1, 0.0) @ w2 + b2

    # Small batch (single grid step).
    B = 8
    x = jax.random.normal(kx, (B, F_IN), jnp.float32)
    out = jax.block_until_ready(classifier_forward(x, w1, b1, w2, b2))
    assert out.shape == (B, NLABEL)
    assert jnp.allclose(out, ref_fn(x), atol=1e-5, rtol=1e-5)

    # Slightly larger, non-multiple-of-8 batch (exercises padding path).
    B2 = 100
    x2 = jax.random.normal(kx2, (B2, F_IN), jnp.float32)
    out2 = jax.block_until_ready(classifier_forward(x2, w1, b1, w2, b2))
    assert out2.shape == (B2, NLABEL)
    assert jnp.allclose(out2, ref_fn(x2), atol=1e-5, rtol=1e-5)

    print("KERNEL_OK")
</pallas_src>

<mosaic_0001>
module attributes {stable_mosaic.version = 11 : i64} {
  func.func @_mlp_kernel(%arg0: i32, %arg1: memref<8x2xf32, #tpu.memory_space<vmem>>, %arg2: memref<2x128xf32, #tpu.memory_space<vmem>>, %arg3: memref<1x128xf32, #tpu.memory_space<vmem>>, %arg4: memref<128x128xf32, #tpu.memory_space<vmem>>, %arg5: memref<1x128xf32, #tpu.memory_space<vmem>>, %arg6: memref<8x128xf32, #tpu.memory_space<vmem>>) attributes {dimension_semantics = [#tpu.dimension_semantics<parallel>], iteration_bounds = array<i64: 1>, scalar_prefetch = 0 : i64, scratch_operands = 0 : i64, tpu.core_type = #tpu.core_type<tc>, window_params = [{transform_indices = @transform_0, window_bounds = array<i64: 8, 2>}, {pipeline_mode = #tpu.pipeline_mode<synchronous>, transform_indices = @transform_1, window_bounds = array<i64: 2, 128>}, {pipeline_mode = #tpu.pipeline_mode<synchronous>, transform_indices = @transform_2, window_bounds = array<i64: 1, 128>}, {pipeline_mode = #tpu.pipeline_mode<synchronous>, transform_indices = @transform_3, window_bounds = array<i64: 128, 128>}, {pipeline_mode = #tpu.pipeline_mode<synchronous>, transform_indices = @transform_4, window_bounds = array<i64: 1, 128>}, {transform_indices = @transform_5, window_bounds = array<i64: 8, 128>}]} {
    %c0 = arith.constant 0 : index
    %c0_0 = arith.constant 0 : index
    %0 = vector.load %arg1[%c0, %c0_0] : memref<8x2xf32, #tpu.memory_space<vmem>>, vector<8x2xf32>
    %c0_1 = arith.constant 0 : index
    %c0_2 = arith.constant 0 : index
    %1 = vector.load %arg2[%c0_1, %c0_2] : memref<2x128xf32, #tpu.memory_space<vmem>>, vector<2x128xf32>
    %2 = vector.extract_strided_slice %0 {offsets = [0, 0], sizes = [8, 1], strides = [1, 1]} : vector<8x2xf32> to vector<8x1xf32>
    %3 = vector.extract_strided_slice %1 {offsets = [0, 0], sizes = [1, 128], strides = [1, 1]} : vector<2x128xf32> to vector<1x128xf32>
    %4 = vector.broadcast %2 : vector<8x1xf32> to vector<8x128xf32>
    %5 = vector.broadcast %3 : vector<1x128xf32> to vector<8x128xf32>
    %6 = arith.mulf %4, %5 : vector<8x128xf32>
    %7 = vector.extract_strided_slice %0 {offsets = [0, 1], sizes = [8, 1], strides = [1, 1]} : vector<8x2xf32> to vector<8x1xf32>
    %8 = vector.extract_strided_slice %1 {offsets = [1, 0], sizes = [1, 128], strides = [1, 1]} : vector<2x128xf32> to vector<1x128xf32>
    %9 = vector.broadcast %7 : vector<8x1xf32> to vector<8x128xf32>
    %10 = vector.broadcast %8 : vector<1x128xf32> to vector<8x128xf32>
    %11 = arith.mulf %9, %10 : vector<8x128xf32>
    %12 = arith.addf %6, %11 : vector<8x128xf32>
    %c0_3 = arith.constant 0 : index
    %c0_4 = arith.constant 0 : index
    %13 = vector.load %arg3[%c0_3, %c0_4] : memref<1x128xf32, #tpu.memory_space<vmem>>, vector<1x128xf32>
    %14 = vector.broadcast %13 : vector<1x128xf32> to vector<8x128xf32>
    %15 = arith.addf %12, %14 : vector<8x128xf32>
    %cst = arith.constant 0.000000e+00 : f32
    %16 = vector.broadcast %cst : f32 to vector<8x128xf32>
    %17 = arith.maximumf %15, %16 : vector<8x128xf32>
    %c0_5 = arith.constant 0 : index
    %c0_6 = arith.constant 0 : index
    %18 = vector.load %arg4[%c0_5, %c0_6] : memref<128x128xf32, #tpu.memory_space<vmem>>, vector<128x128xf32>
    %cst_7 = arith.constant dense<0.000000e+00> : vector<8x128xf32>
    %19 = tpu.matmul %17, %18, %cst_7 {dimension_numbers = #tpu.dot_dimension_numbers<[1], [0], [0], [1], [0, 0, 1, 1], [], []>} : vector<8x128xf32>, vector<128x128xf32>, vector<8x128xf32> -> vector<8x128xf32>
    %c0_8 = arith.constant 0 : index
    %c0_9 = arith.constant 0 : index
    %20 = vector.load %arg5[%c0_8, %c0_9] : memref<1x128xf32, #tpu.memory_space<vmem>>, vector<1x128xf32>
    %21 = vector.broadcast %20 : vector<1x128xf32> to vector<8x128xf32>
    %22 = arith.addf %19, %21 : vector<8x128xf32>
    %c0_10 = arith.constant 0 : index
    %c0_11 = arith.constant 0 : index
    %23 = vector.load %arg6[%c0_10, %c0_11] : memref<8x128xf32, #tpu.memory_space<vmem>>, vector<8x128xf32>
    tpu.vector_store %arg6[%c0_10, %c0_11], %22 {strides = array<i32>} : memref<8x128xf32, #tpu.memory_space<vmem>>, vector<8x128xf32>,
    return
  }
  func.func @transform_0(%arg0: i32) -> (i32, i32) {
    %c0_i32 = arith.constant 0 : i32
    %c0_i32_0 = arith.constant 0 : i32
    return %arg0, %c0_i32 : i32, i32
  }
  func.func @transform_1(%arg0: i32) -> (i32, i32) {
    %c0_i32 = arith.constant 0 : i32
    %c0_i32_0 = arith.constant 0 : i32
    %c0_i32_1 = arith.constant 0 : i32
    return %c0_i32, %c0_i32_0 : i32, i32
  }
  func.func @transform_2(%arg0: i32) -> (i32, i32) {
    %c0_i32 = arith.constant 0 : i32
    %c0_i32_0 = arith.constant 0 : i32
    %c0_i32_1 = arith.constant 0 : i32
    return %c0_i32, %c0_i32_0 : i32, i32
  }
  func.func @transform_3(%arg0: i32) -> (i32, i32) {
    %c0_i32 = arith.constant 0 : i32
    %c0_i32_0 = arith.constant 0 : i32
    %c0_i32_1 = arith.constant 0 : i32
    return %c0_i32, %c0_i32_0 : i32, i32
  }
  func.func @transform_4(%arg0: i32) -> (i32, i32) {
    %c0_i32 = arith.constant 0 : i32
    %c0_i32_0 = arith.constant 0 : i32
    %c0_i32_1 = arith.constant 0 : i32
    return %c0_i32, %c0_i32_0 : i32, i32
  }
  func.func @transform_5(%arg0: i32) -> (i32, i32) {
    %c0_i32 = arith.constant 0 : i32
    %c0_i32_0 = arith.constant 0 : i32
    return %arg0, %c0_i32 : i32, i32
  }
}

</mosaic_0001>

<llo_original>
// kernel: tpu_custom_call.1
$region0: #{tpu_custom_call.1}
  #allocation0 [shape = 'u32[]', space=smem, size = 0x4, offset = 0x4, fixed_abs, tag = 'smem constant byte address 0x4 - core index']
  #allocation1 [shape = 'u32[144,128]{1,0:T(1,128)}', space=vmem, size = 0x12000, scoped, tag = 'internal scratch']
  %s0 = inlined_call_operand.vmem [shape: f32[8,2], index: 0, kind: input, shape index: {}]
  %s1 = inlined_call_operand.vmem [shape: f32[2,128], index: 1, kind: input, shape index: {}]
  %s2 = inlined_call_operand.vmem [shape: f32[1,128], index: 2, kind: input, shape index: {}]
  %s3 = inlined_call_operand.hbm [shape: f32[128,128], index: 3, kind: input, shape index: {}]
  %s4 = inlined_call_operand.vmem [shape: f32[1,128], index: 4, kind: input, shape index: {}]
  %s5 = inlined_call_operand.hbm [shape: f32[8,128], index: 5, kind: output, shape index: {}]
  %s6 = sld [smem:[#allocation0]]
  $region34: #{tpu_custom_call.1} parent=0
    _
  %s8 = ssub.s32 1, %s6
  %s9 = scalar_select 0, %s8, %s6
  $region1: #{tpu_custom_call.1} parent=0
    #allocation2 [shape = 'u8[65536]{0}', space=vmem, size = 0x10000, scoped, tag = 'input window, operand 3, single buffered']
    #allocation3 [shape = 's32[1]{0}', space=sflag, size = 0x4, scoped, tag = 'scoped memory for tpu_custom_call.1']
    #allocation4 [shape = 's32[1]{0}', space=sflag, size = 0x4, scoped, tag = 'scoped memory for tpu_custom_call.1']
    #allocation5 [shape = 'u8[4096]{0}', space=vmem, size = 0x1000, scoped, tag = 'output window, operand 0, single buffered']
    %10 = vsyncpa [#allocation3], 0
    %11 = vsyncpa [#allocation4], 0
    // Predicated region
    $region2: #{tpu_custom_call.1} parent=1 // pred_check
      _
    $region3: #{tpu_custom_call.1} parent=1 // pred_check_branch
      %13 = sbr.rel (0) target = $region5
    $region4: #{tpu_custom_call.1} parent=1 // pred_region
      _
    $region5: #{tpu_custom_call.1} parent=1 // pred_fallthru
      _
    // Predicated region
    $region6: #{tpu_custom_call.1} parent=1 // pred_check
      _
    $region7: #{tpu_custom_call.1} parent=1 // pred_check_branch
      %15 = sbr.rel (0) target = $region9
    $region8: #{tpu_custom_call.1} parent=1 // pred_region
      _
    $region9: #{tpu_custom_call.1} parent=1 // pred_fallthru
      _
    // Predicated region
    $region10: #{tpu_custom_call.1} parent=1 // pred_check
      _
    $region11: #{tpu_custom_call.1} parent=1 // pred_check_branch
      %17 = sbr.rel (0) target = $region13
    $region12: #{tpu_custom_call.1} parent=1 // pred_region
      _
    $region13: #{tpu_custom_call.1} parent=1 // pred_fallthru
      _
    // Predicated region
    $region14: #{tpu_custom_call.1} parent=1 // pred_check
      _
    $region15: #{tpu_custom_call.1} parent=1 // pred_check_branch
      %19 = sbr.rel (0) target = $region17
    $region16: #{tpu_custom_call.1} parent=1 // pred_region
      %s21 = ssub.s32 2048, 2048
      %22 = vsyncadd [#allocation3], %s21
      %s23 = sshll.u32 [#allocation2], 4
      %s24 = int_to_ptr.vmem [resolvable:$true] %s23
      %29 = dma.hbm_to_vmem [thread:$0]  %s3, 2048, %s24, [#allocation3], 128, 128, 8
    $region17: #{tpu_custom_call.1} parent=1 // pred_fallthru
      _
    // Predicated region
    $region18: #{tpu_custom_call.1} parent=1 // pred_check
      _
    $region19: #{tpu_custom_call.1} parent=1 // pred_check_branch
      %31 = sbr.rel (0) target = $region21
    $region20: #{tpu_custom_call.1} parent=1 // pred_region
      _
    $region21: #{tpu_custom_call.1} parent=1 // pred_fallthru
      _
    // Predicated region
    $region22: #{tpu_custom_call.1} parent=1 // pred_check
      _
    $region23: #{tpu_custom_call.1} parent=1 // pred_check_branch
      %33 = sbr.rel (0) target = $region25
    $region24: #{tpu_custom_call.1} parent=1 // pred_region
      %34 = dma.done [#allocation3], 2048
    $region25: #{tpu_custom_call.1} parent=1 // pred_fallthru
      _
    %v35 = vld [vmem:[%s0] sm:$0xff]
    %v36 = vld [vmem:[%s1] sm:$0x3]
    %38 = vset.pattern.permute.xlu0 0
    %39 = vperm.xlu0 %38, %v35
    %v40 = vpop.permute.xlu0 %39
    %v42 = vlaneseq
    %v43 = vshrl.u32 %v42, 7
    %v44 = vsub.s32 0, %v43
    %v45 = vrot.slane %v36, %v44
    %v46 = vmul.f32 %v40, %v45
    %47 = vset.pattern.permute.xlu0 1
    %48 = vperm.xlu0 %47, %v35
    %v49 = vpop.permute.xlu0 %48
    %v51 = vlaneseq
    %v52 = vshrl.u32 %v51, 7
    %v53 = vsub.s32 1, %v52
    %v54 = vrot.slane %v36, %v53
    %v55 = vmul.f32 %v49, %v54
    %v56 = vadd.f32 %v46, %v55
    %v57 = vld [vmem:[%s2] sm:$0x1]
    %v59 = vlaneseq
    %v60 = vshrl.u32 %v59, 7
    %v61 = vsub.s32 0, %v60
    %v62 = vrot.slane %v57, %v61
    %v64 = vadd.f32 %v56, %v62
    %v65 = vmax.f32 %v64, 0.0
    %v66 = vld [vmem:[#allocation2] sm:$0xff]
    %v67 = vld [vmem:[#allocation2 + $0x8] sm:$0xff]
    %v68 = vld [vmem:[#allocation2 + $0x10] sm:$0xff]
    %v69 = vld [vmem:[#allocation2 + $0x18] sm:$0xff]
    %v70 = vld [vmem:[#allocation2 + $0x20] sm:$0xff]
    %v71 = vld [vmem:[#allocation2 + $0x28] sm:$0xff]
    %v72 = vld [vmem:[#allocation2 + $0x30] sm:$0xff]
    %v73 = vld [vmem:[#allocation2 + $0x38] sm:$0xff]
    %v74 = vld [vmem:[#allocation2 + $0x40] sm:$0xff]
    %v75 = vld [vmem:[#allocation2 + $0x48] sm:$0xff]
    %v76 = vld [vmem:[#allocation2 + $0x50] sm:$0xff]
    %v77 = vld [vmem:[#allocation2 + $0x58] sm:$0xff]
    %v78 = vld [vmem:[#allocation2 + $0x60] sm:$0xff]
    %v79 = vld [vmem:[#allocation2 + $0x68] sm:$0xff]
    %v80 = vld [vmem:[#allocation2 + $0x70] sm:$0xff]
    %v81 = vld [vmem:[#allocation2 + $0x78] sm:$0xff]
    %v82 = vld [vmem:[%s4] sm:$0x1]
    %v84 = vlaneseq
    %v85 = vshrl.u32 %v84, 7
    %v86 = vsub.s32 0, %v85
    %v87 = vrot.slane %v82, %v86
    %89 = vmatprep.subr.mxu0 0.0
    %90 = vmatpush1.msra.mxu0 %v66
    %91 = vmatprep.subr.mxu0 0.0
    %92 = vmatpush1.msra.mxu0 %v67
    %93 = vmatprep.subr.mxu0 0.0
    %94 = vmatpush1.msra.mxu0 %v68
    %95 = vmatprep.subr.mxu0 0.0
    %96 = vmatpush1.msra.mxu0 %v69
    %97 = vmatprep.subr.mxu0 0.0
    %98 = vmatpush1.msra.mxu0 %v70
    %99 = vmatprep.subr.mxu0 0.0
    %100 = vmatpush1.msra.mxu0 %v71
    %101 = vmatprep.subr.mxu0 0.0
    %102 = vmatpush1.msra.mxu0 %v72
    %103 = vmatprep.subr.mxu0 0.0
    %104 = vmatpush1.msra.mxu0 %v73
    %105 = vmatprep.subr.mxu0 0.0
    %106 = vmatpush1.msra.mxu0 %v74
    %107 = vmatprep.subr.mxu0 0.0
    %108 = vmatpush1.msra.mxu0 %v75
    %109 = vmatprep.subr.mxu0 0.0
    %110 = vmatpush1.msra.mxu0 %v76
    %111 = vmatprep.subr.mxu0 0.0
    %112 = vmatpush1.msra.mxu0 %v77
    %113 = vmatprep.subr.mxu0 0.0
    %114 = vmatpush1.msra.mxu0 %v78
    %115 = vmatprep.subr.mxu0 0.0
    %116 = vmatpush1.msra.mxu0 %v79
    %117 = vmatprep.subr.mxu0 0.0
    %118 = vmatpush1.msra.mxu0 %v80
    %119 = vmatprep.subr.mxu0 0.0
    %120 = vmatpush1.msra.mxu0 %v81
    %121 = vmatprep.subr.mxu0 0.0
    %122 = vmatpush1.msra.mxu0 0.0
    %123 = vmatprep.subr.mxu0 0.0
    %124 = vmatpush1.msra.mxu0 0.0
    %125 = vmatprep.subr.mxu0 0.0
    %126 = vmatpush1.msra.mxu0 0.0
    %127 = vmatprep.subr.mxu0 0.0
    %128 = vmatpush1.msra.mxu0 0.0
    %129 = vmatprep.subr.mxu0 0.0
    %130 = vmatpush1.msra.mxu0 0.0
    %131 = vmatprep.subr.mxu0 0.0
    %132 = vmatpush1.msra.mxu0 0.0
    %133 = vmatprep.subr.mxu0 0.0
    %134 = vmatpush1.msra.mxu0 0.0
    %135 = vmatprep.subr.mxu0 0.0
    %136 = vmatpush1.msra.mxu0 0.0
    %137 = vmatprep.subr.mxu0 0.0
    %138 = vmatpush1.msra.mxu0 0.0
    %139 = vmatprep.subr.mxu0 0.0
    %140 = vmatpush1.msra.mxu0 0.0
    %141 = vmatprep.subr.mxu0 0.0
    %142 = vmatpush1.msra.mxu0 0.0
    %143 = vmatprep.subr.mxu0 0.0
    %144 = vmatpush1.msra.mxu0 0.0
    %145 = vmatprep.subr.mxu0 0.0
    %146 = vmatpush1.msra.mxu0 0.0
    %147 = vmatprep.subr.mxu0 0.0
    %148 = vmatpush1.msra.mxu0 0.0
    %149 = vmatprep.subr.mxu0 0.0
    %150 = vmatpush1.msra.mxu0 0.0
    %151 = vmatprep.subr.mxu0 0.0
    %152 = vmatpush1.msra.mxu0 0.0
    %153 = vmatprep.mubr.f32.mxu0 0.0
    %154 = vmatmul.mubr.f32.gmra.mrb[0].mxu0 %v65
    %v155 = vpop.f32.mrb[0].mxu0
    %v156 = vadd.f32 %v87, %v155
    %v157 = vpop.f32.mrb[0].mxu0
    %158 = vdwg.mxu0
    %159 = vst [vmem:[#allocation5] sm:$0xff] %v156
    // Predicated region
    $region26: #{tpu_custom_call.1} parent=1 // pred_check
      _
    $region27: #{tpu_custom_call.1} parent=1 // pred_check_branch
      %161 = sbr.rel (0) target = $region29
    $region28: #{tpu_custom_call.1} parent=1 // pred_region
      %s163 = ssub.s32 128, 128
      %164 = vsyncadd [#allocation4], %s163
      %s166 = sshll.u32 [#allocation5], 4
      %s167 = int_to_ptr.vmem [resolvable:$true] %s166
      %169 = dma.vmem_to_hbm [thread:$0]  %s167, 128, %s5, [#allocation4]
    $region29: #{tpu_custom_call.1} parent=1 // pred_fallthru
      _
    // Predicated region
    $region30: #{tpu_custom_call.1} parent=1 // pred_check
      _
    $region31: #{tpu_custom_call.1} parent=1 // pred_check_branch
      %171 = sbr.rel (0) target = $region33
    $region32: #{tpu_custom_call.1} parent=1 // pred_region
      %172 = dma.done [#allocation4], 128
    $region33: #{tpu_custom_call.1} parent=1 // pred_fallthru
      _
    %173 = vsyncpa [#allocation3], 1
    %174 = vsyncpa [#allocation4], 1

</llo_original>
